<compile_context>
chip_gen: v7x
topology: tpu7x:2x2x1
jax: 0.10.0
libtpu: 0.0.40
codegen_flags: <defaults>
</compile_context>

<pallas_src>
import jax
import jax.numpy as jnp
from jax.experimental import pallas as pl
from jax.experimental.pallas import tpu as pltpu

# ---------------- problem sizes (small, consistent with the module) ----------------
B = 2            # batch
S = 8            # seq_len
H = 32           # hidden_size
T = 16           # num_topics
TH = 64          # topic_hidden_size
L = 5            # number of languages ('en','fr','de','es','it')
EPS = 1e-5       # nn.LayerNorm default eps


def _layernorm(x, gamma, beta):
    mu = jnp.mean(x, axis=-1, keepdims=True)
    var = jnp.mean((x - mu) ** 2, axis=-1, keepdims=True)
    return gamma * ((x - mu) * jax.lax.rsqrt(var + EPS)) + beta


def topic_encoder_kernel(
    lang_ids_ref,                 # SMEM  [B] int32 (scalar-prefetch; consumed by index_maps)
    seq_ref,                      # VMEM  (1, S, H)
    mask_ref,                     # VMEM  (1, 1, S)   mask pre-scaled by 1/sum(mask)
    lda_ref,                      # VMEM  (1, 1, T)
    w1_ref,                       # VMEM  (1, H, H)   gathered adapter linear-1 weight
    w2_ref,                       # VMEM  (1, H, H)   gathered adapter linear-2 weight
    small_ref,                    # VMEM  (1, 1, 4H)  gathered [b1 | ln_g | ln_b | b2]
    fwh_ref, fwt_ref, fb_ref,     # VMEM  (H, TH), (T, TH), (1, TH)  fusion linear (resident)
    fg_ref, fbeta_ref,            # VMEM  (1, TH), (1, TH)           fusion layernorm (resident)
    out_ref,                      # VMEM  (1, 1, TH)
):
    x = seq_ref[0]                                   # [S, H] f32

    row = small_ref[0]                               # [1, 4H]
    b1 = row[:, 0 * H:1 * H]                         # [1, H]
    g1 = row[:, 1 * H:2 * H]
    be1 = row[:, 2 * H:3 * H]
    b2 = row[:, 3 * H:4 * H]

    # ---- language adapter (weights already selected per-batch by the index_map gather) ----
    h = jnp.dot(x, w1_ref[0], preferred_element_type=jnp.float32) + b1
    h = _layernorm(h, g1, be1)
    h = jnp.maximum(h, 0.0)                          # ReLU
    adapted = jnp.dot(h, w2_ref[0], preferred_element_type=jnp.float32) + b2   # [S, H]

    # ---- attention-mask pooling as an MXU matmul ----
    # mask_ref is [1, S] and already scaled by 1/clamp(sum(mask),1), so this is
    # exactly masked.sum(0)/sum(mask) with no in-kernel reduce/divide.
    pooled = jnp.dot(mask_ref[0], adapted, preferred_element_type=jnp.float32)  # [1, H]

    # ---- topic fusion: Linear on concat([pooled, lda]) split into two matmuls ----
    lda = lda_ref[0]                                 # [1, T]
    z = (jnp.dot(pooled, fwh_ref[...], preferred_element_type=jnp.float32)
         + jnp.dot(lda, fwt_ref[...], preferred_element_type=jnp.float32)
         + fb_ref[...])                              # [1, TH]
    z = _layernorm(z, fg_ref[...], fbeta_ref[...])
    z = jnp.maximum(z, 0.0)                          # ReLU
    # TODO(synk): Dropout is identity here (eval mode); no PRNG applied.

    out_ref[0] = z                                   # [1, TH]


def topic_encoder_pallas(seq, attn_mask, lda_feats, language_ids, params):
    """seq: [B,S,H] f32, attn_mask: [B,S] f32, lda_feats: [B,T] f32,
    language_ids: [B] int32."""
    # Validate language ids (index_map gather has no bounds check on TPU).
    lang_ids = jnp.clip(language_ids.astype(jnp.int32), 0, L - 1)

    # Fold the mask-sum normalization into the mask itself (lane-last layout),
    # clamping the denominator so an all-zero mask row cannot produce inf/NaN.
    denom = jnp.maximum(attn_mask.sum(-1, keepdims=True), 1.0)            # [B, 1]
    mask_scaled = (attn_mask / denom).reshape(B, 1, S).astype(jnp.float32)
    lda3 = lda_feats.reshape(B, 1, T).astype(jnp.float32)

    # Concatenate all per-language 1-D params into one lane-dense gather table.
    small = jnp.concatenate(
        [params["b1"], params["g1"], params["be1"], params["b2"]], axis=-1
    ).reshape(L, 1, 4 * H)                                                # (L, 1, 4H)

    grid_spec = pltpu.PrefetchScalarGridSpec(
        num_scalar_prefetch=1,
        grid=(B,),
        in_specs=[
            pl.BlockSpec((1, S, H), lambda b, lid: (b, 0, 0)),        # sequence_output
            pl.BlockSpec((1, 1, S), lambda b, lid: (b, 0, 0)),        # scaled attention_mask
            pl.BlockSpec((1, 1, T), lambda b, lid: (b, 0, 0)),        # lda features
            pl.BlockSpec((1, H, H), lambda b, lid: (lid[b], 0, 0)),   # w1 (language-gathered)
            pl.BlockSpec((1, H, H), lambda b, lid: (lid[b], 0, 0)),   # w2 (language-gathered)
            pl.BlockSpec((1, 1, 4 * H), lambda b, lid: (lid[b], 0, 0)),  # [b1|g1|be1|b2] row
            pl.BlockSpec((H, TH), lambda b, lid: (0, 0)),             # fusion W_h (resident)
            pl.BlockSpec((T, TH), lambda b, lid: (0, 0)),             # fusion W_t (resident)
            pl.BlockSpec((1, TH), lambda b, lid: (0, 0)),             # fusion bias
            pl.BlockSpec((1, TH), lambda b, lid: (0, 0)),             # fusion ln gamma
            pl.BlockSpec((1, TH), lambda b, lid: (0, 0)),             # fusion ln beta
        ],
        out_specs=pl.BlockSpec((1, 1, TH), lambda b, lid: (b, 0, 0)),
    )

    out = pl.pallas_call(
        topic_encoder_kernel,
        grid_spec=grid_spec,
        out_shape=jax.ShapeDtypeStruct((B, 1, TH), jnp.float32),
        compiler_params=pltpu.CompilerParams(
            # Tiny grid (B=2): keep it on one core; splitting across v7x's two
            # TensorCores only duplicates fixed per-step overhead.
            dimension_semantics=("arbitrary",),
        ),
    )(
        lang_ids, seq, mask_scaled, lda3,
        params["w1"], params["w2"], small,
        params["fwh"], params["fwt"], params["fb"], params["fg"], params["fbeta"],
    )
    return out.reshape(B, TH)


def topic_encoder_ref(seq, attn_mask, lda_feats, language_ids, params):
    """Pure-JAX reference mirroring the PyTorch forward (eval mode)."""
    adapted = jnp.zeros_like(seq)
    for l in range(L):
        h1 = seq @ params["w1"][l] + params["b1"][l]
        h1 = _layernorm(h1, params["g1"][l], params["be1"][l])
        h1 = jnp.maximum(h1, 0.0)
        h2 = h1 @ params["w2"][l] + params["b2"][l]
        lang_mask = (language_ids == l).astype(jnp.float32)[:, None, None]
        adapted = adapted + lang_mask * h2
    masked = adapted * attn_mask[..., None]
    pooled = masked.sum(1) / attn_mask.sum(1, keepdims=True)
    z = pooled @ params["fwh"] + lda_feats @ params["fwt"] + params["fb"]
    z = _layernorm(z, params["fg"], params["fbeta"])
    return jnp.maximum(z, 0.0)


def make_params(key):
    ks = jax.random.split(key, 8)
    p = {
        "w1": jax.random.normal(ks[0], (L, H, H), jnp.float32) * 0.05,
        "b1": jax.random.normal(ks[1], (L, H), jnp.float32) * 0.01,
        "g1": jnp.ones((L, H), jnp.float32),
        "be1": jnp.zeros((L, H), jnp.float32),
        "w2": jax.random.normal(ks[2], (L, H, H), jnp.float32) * 0.05,
        "b2": jax.random.normal(ks[3], (L, H), jnp.float32) * 0.01,
        "fwh": jax.random.normal(ks[4], (H, TH), jnp.float32) * 0.05,
        "fwt": jax.random.normal(ks[5], (T, TH), jnp.float32) * 0.05,
        "fb": jax.random.normal(ks[6], (1, TH), jnp.float32) * 0.01,
        "fg": jnp.ones((1, TH), jnp.float32),
        "fbeta": jnp.zeros((1, TH), jnp.float32),
    }
    return p


if __name__ == "__main__":
    key = jax.random.PRNGKey(0)
    kp, kx, kl = jax.random.split(key, 3)

    params = make_params(kp)

    seq = jax.random.normal(kx, (B, S, H), jnp.float32)
    attn_mask = jnp.array(
        [[1.0] * S, [1.0] * 5 + [0.0] * (S - 5)], dtype=jnp.float32
    )
    # precomputed LDA topic distributions (stand-in for gensim get_lda_features)
    lda_logits = jax.random.normal(kl, (B, T), jnp.float32)
    lda_feats = jax.nn.softmax(lda_logits, axis=-1)
    language_ids = jnp.array([0, 3], dtype=jnp.int32)

    out = topic_encoder_pallas(seq, attn_mask, lda_feats, language_ids, params)
    out = jax.block_until_ready(out)

    ref = topic_encoder_ref(seq, attn_mask, lda_feats, language_ids, params)
    assert out.shape == (B, TH)
    assert jnp.allclose(out, ref, rtol=1e-4, atol=1e-4), (
        f"max diff {jnp.max(jnp.abs(out - ref))}"
    )
    print("KERNEL_OK")
</pallas_src>

<mosaic_0001>
module attributes {stable_mosaic.version = 11 : i64} {
  func.func @topic_encoder_kernel(%arg0: i32, %arg1: memref<2xi32, #tpu.memory_space<smem>>, %arg2: memref<1x8x32xf32, #tpu.memory_space<vmem>>, %arg3: memref<1x1x8xf32, #tpu.memory_space<vmem>>, %arg4: memref<1x1x16xf32, #tpu.memory_space<vmem>>, %arg5: memref<1x32x32xf32, #tpu.memory_space<vmem>>, %arg6: memref<1x32x32xf32, #tpu.memory_space<vmem>>, %arg7: memref<1x1x128xf32, #tpu.memory_space<vmem>>, %arg8: memref<32x64xf32, #tpu.memory_space<vmem>>, %arg9: memref<16x64xf32, #tpu.memory_space<vmem>>, %arg10: memref<1x64xf32, #tpu.memory_space<vmem>>, %arg11: memref<1x64xf32, #tpu.memory_space<vmem>>, %arg12: memref<1x64xf32, #tpu.memory_space<vmem>>, %arg13: memref<1x1x64xf32, #tpu.memory_space<vmem>>) attributes {dimension_semantics = [#tpu.dimension_semantics<arbitrary>], iteration_bounds = array<i64: 2>, scalar_prefetch = 1 : i64, scratch_operands = 0 : i64, tpu.core_type = #tpu.core_type<tc>, window_params = [{transform_indices = @transform_0, window_bounds = array<i64: 1, 8, 32>}, {transform_indices = @transform_1, window_bounds = array<i64: 1, 1, 8>}, {transform_indices = @transform_2, window_bounds = array<i64: 1, 1, 16>}, {transform_indices = @transform_3, window_bounds = array<i64: 1, 32, 32>}, {transform_indices = @transform_4, window_bounds = array<i64: 1, 32, 32>}, {transform_indices = @transform_5, window_bounds = array<i64: 1, 1, 128>}, {pipeline_mode = #tpu.pipeline_mode<synchronous>, transform_indices = @transform_6, window_bounds = array<i64: 32, 64>}, {pipeline_mode = #tpu.pipeline_mode<synchronous>, transform_indices = @transform_7, window_bounds = array<i64: 16, 64>}, {pipeline_mode = #tpu.pipeline_mode<synchronous>, transform_indices = @transform_8, window_bounds = array<i64: 1, 64>}, {pipeline_mode = #tpu.pipeline_mode<synchronous>, transform_indices = @transform_9, window_bounds = array<i64: 1, 64>}, {pipeline_mode = #tpu.pipeline_mode<synchronous>, transform_indices = @transform_10, window_bounds = array<i64: 1, 64>}, {transform_indices = @transform_11, window_bounds = array<i64: 1, 1, 64>}]} {
    %c0 = arith.constant 0 : index
    %c0_0 = arith.constant 0 : index
    %c0_1 = arith.constant 0 : index
    %0 = vector.load %arg2[%c0, %c0_0, %c0_1] : memref<1x8x32xf32, #tpu.memory_space<vmem>>, vector<1x8x32xf32>
    %1 = vector.shape_cast %0 : vector<1x8x32xf32> to vector<8x32xf32>
    %c0_2 = arith.constant 0 : index
    %c0_3 = arith.constant 0 : index
    %c0_4 = arith.constant 0 : index
    %2 = vector.load %arg7[%c0_2, %c0_3, %c0_4] : memref<1x1x128xf32, #tpu.memory_space<vmem>>, vector<1x1x128xf32>
    %3 = vector.shape_cast %2 : vector<1x1x128xf32> to vector<1x128xf32>
    %4 = vector.extract_strided_slice %3 {offsets = [0, 0], sizes = [1, 32], strides = [1, 1]} : vector<1x128xf32> to vector<1x32xf32>
    %5 = vector.extract_strided_slice %3 {offsets = [0, 32], sizes = [1, 32], strides = [1, 1]} : vector<1x128xf32> to vector<1x32xf32>
    %6 = vector.extract_strided_slice %3 {offsets = [0, 64], sizes = [1, 32], strides = [1, 1]} : vector<1x128xf32> to vector<1x32xf32>
    %7 = vector.extract_strided_slice %3 {offsets = [0, 96], sizes = [1, 32], strides = [1, 1]} : vector<1x128xf32> to vector<1x32xf32>
    %c0_5 = arith.constant 0 : index
    %c0_6 = arith.constant 0 : index
    %c0_7 = arith.constant 0 : index
    %8 = vector.load %arg5[%c0_5, %c0_6, %c0_7] : memref<1x32x32xf32, #tpu.memory_space<vmem>>, vector<1x32x32xf32>
    %9 = vector.shape_cast %8 : vector<1x32x32xf32> to vector<32x32xf32>
    %cst = arith.constant dense<0.000000e+00> : vector<8x32xf32>
    %10 = tpu.matmul %1, %9, %cst {dimension_numbers = #tpu.dot_dimension_numbers<[1], [0], [0], [1], [0, 0, 1, 1], [], []>} : vector<8x32xf32>, vector<32x32xf32>, vector<8x32xf32> -> vector<8x32xf32>
    %11 = vector.broadcast %4 : vector<1x32xf32> to vector<8x32xf32>
    %12 = arith.addf %10, %11 : vector<8x32xf32>
    %cst_8 = arith.constant dense<0.000000e+00> : vector<8xf32>
    %13 = vector.multi_reduction <add>, %12, %cst_8 [1] : vector<8x32xf32> to vector<8xf32>
    %14 = vector.shape_cast %13 : vector<8xf32> to vector<8x1xf32>
    %cst_9 = arith.constant 3.200000e+01 : f32
    %15 = vector.broadcast %cst_9 : f32 to vector<8x1xf32>
    %16 = arith.divf %14, %15 : vector<8x1xf32>
    %17 = vector.broadcast %16 : vector<8x1xf32> to vector<8x32xf32>
    %18 = arith.subf %12, %17 : vector<8x32xf32>
    %19 = arith.mulf %18, %18 : vector<8x32xf32>
    %cst_10 = arith.constant dense<0.000000e+00> : vector<8xf32>
    %20 = vector.multi_reduction <add>, %19, %cst_10 [1] : vector<8x32xf32> to vector<8xf32>
    %21 = vector.shape_cast %20 : vector<8xf32> to vector<8x1xf32>
    %cst_11 = arith.constant 3.200000e+01 : f32
    %22 = vector.broadcast %cst_11 : f32 to vector<8x1xf32>
    %23 = arith.divf %21, %22 : vector<8x1xf32>
    %24 = vector.broadcast %16 : vector<8x1xf32> to vector<8x32xf32>
    %25 = arith.subf %12, %24 : vector<8x32xf32>
    %cst_12 = arith.constant 9.99999974E-6 : f32
    %26 = vector.broadcast %cst_12 : f32 to vector<8x1xf32>
    %27 = arith.addf %23, %26 : vector<8x1xf32>
    %28 = math.rsqrt %27 : vector<8x1xf32>
    %29 = vector.broadcast %28 : vector<8x1xf32> to vector<8x32xf32>
    %30 = arith.mulf %25, %29 : vector<8x32xf32>
    %31 = vector.broadcast %5 : vector<1x32xf32> to vector<8x32xf32>
    %32 = arith.mulf %31, %30 : vector<8x32xf32>
    %33 = vector.broadcast %6 : vector<1x32xf32> to vector<8x32xf32>
    %34 = arith.addf %32, %33 : vector<8x32xf32>
    %cst_13 = arith.constant 0.000000e+00 : f32
    %35 = vector.broadcast %cst_13 : f32 to vector<8x32xf32>
    %36 = arith.maximumf %34, %35 : vector<8x32xf32>
    %c0_14 = arith.constant 0 : index
    %c0_15 = arith.constant 0 : index
    %c0_16 = arith.constant 0 : index
    %37 = vector.load %arg6[%c0_14, %c0_15, %c0_16] : memref<1x32x32xf32, #tpu.memory_space<vmem>>, vector<1x32x32xf32>
    %38 = vector.shape_cast %37 : vector<1x32x32xf32> to vector<32x32xf32>
    %cst_17 = arith.constant dense<0.000000e+00> : vector<8x32xf32>
    %39 = tpu.matmul %36, %38, %cst_17 {dimension_numbers = #tpu.dot_dimension_numbers<[1], [0], [0], [1], [0, 0, 1, 1], [], []>} : vector<8x32xf32>, vector<32x32xf32>, vector<8x32xf32> -> vector<8x32xf32>
    %40 = vector.broadcast %7 : vector<1x32xf32> to vector<8x32xf32>
    %41 = arith.addf %39, %40 : vector<8x32xf32>
    %c0_18 = arith.constant 0 : index
    %c0_19 = arith.constant 0 : index
    %c0_20 = arith.constant 0 : index
    %42 = vector.load %arg3[%c0_18, %c0_19, %c0_20] : memref<1x1x8xf32, #tpu.memory_space<vmem>>, vector<1x1x8xf32>
    %43 = vector.shape_cast %42 : vector<1x1x8xf32> to vector<1x8xf32>
    %cst_21 = arith.constant dense<0.000000e+00> : vector<1x32xf32>
    %44 = tpu.matmul %43, %41, %cst_21 {dimension_numbers = #tpu.dot_dimension_numbers<[1], [0], [0], [1], [0, 0, 1, 1], [], []>} : vector<1x8xf32>, vector<8x32xf32>, vector<1x32xf32> -> vector<1x32xf32>
    %c0_22 = arith.constant 0 : index
    %c0_23 = arith.constant 0 : index
    %c0_24 = arith.constant 0 : index
    %45 = vector.load %arg4[%c0_22, %c0_23, %c0_24] : memref<1x1x16xf32, #tpu.memory_space<vmem>>, vector<1x1x16xf32>
    %46 = vector.shape_cast %45 : vector<1x1x16xf32> to vector<1x16xf32>
    %c0_25 = arith.constant 0 : index
    %c0_26 = arith.constant 0 : index
    %47 = vector.load %arg8[%c0_25, %c0_26] : memref<32x64xf32, #tpu.memory_space<vmem>>, vector<32x64xf32>
    %cst_27 = arith.constant dense<0.000000e+00> : vector<1x64xf32>
    %48 = tpu.matmul %44, %47, %cst_27 {dimension_numbers = #tpu.dot_dimension_numbers<[1], [0], [0], [1], [0, 0, 1, 1], [], []>} : vector<1x32xf32>, vector<32x64xf32>, vector<1x64xf32> -> vector<1x64xf32>
    %c0_28 = arith.constant 0 : index
    %c0_29 = arith.constant 0 : index
    %49 = vector.load %arg9[%c0_28, %c0_29] : memref<16x64xf32, #tpu.memory_space<vmem>>, vector<16x64xf32>
    %cst_30 = arith.constant dense<0.000000e+00> : vector<1x64xf32>
    %50 = tpu.matmul %46, %49, %cst_30 {dimension_numbers = #tpu.dot_dimension_numbers<[1], [0], [0], [1], [0, 0, 1, 1], [], []>} : vector<1x16xf32>, vector<16x64xf32>, vector<1x64xf32> -> vector<1x64xf32>
    %51 = arith.addf %48, %50 : vector<1x64xf32>
    %c0_31 = arith.constant 0 : index
    %c0_32 = arith.constant 0 : index
    %52 = vector.load %arg10[%c0_31, %c0_32] : memref<1x64xf32, #tpu.memory_space<vmem>>, vector<1x64xf32>
    %53 = arith.addf %51, %52 : vector<1x64xf32>
    %c0_33 = arith.constant 0 : index
    %c0_34 = arith.constant 0 : index
    %54 = vector.load %arg11[%c0_33, %c0_34] : memref<1x64xf32, #tpu.memory_space<vmem>>, vector<1x64xf32>
    %c0_35 = arith.constant 0 : index
    %c0_36 = arith.constant 0 : index
    %55 = vector.load %arg12[%c0_35, %c0_36] : memref<1x64xf32, #tpu.memory_space<vmem>>, vector<1x64xf32>
    %cst_37 = arith.constant dense<0.000000e+00> : vector<1xf32>
    %56 = vector.multi_reduction <add>, %53, %cst_37 [1] : vector<1x64xf32> to vector<1xf32>
    %57 = vector.shape_cast %56 : vector<1xf32> to vector<1x1xf32>
    %cst_38 = arith.constant 6.400000e+01 : f32
    %58 = vector.broadcast %cst_38 : f32 to vector<1x1xf32>
    %59 = arith.divf %57, %58 : vector<1x1xf32>
    %60 = vector.broadcast %59 : vector<1x1xf32> to vector<1x64xf32>
    %61 = arith.subf %53, %60 : vector<1x64xf32>
    %62 = arith.mulf %61, %61 : vector<1x64xf32>
    %cst_39 = arith.constant dense<0.000000e+00> : vector<1xf32>
    %63 = vector.multi_reduction <add>, %62, %cst_39 [1] : vector<1x64xf32> to vector<1xf32>
    %64 = vector.shape_cast %63 : vector<1xf32> to vector<1x1xf32>
    %cst_40 = arith.constant 6.400000e+01 : f32
    %65 = vector.broadcast %cst_40 : f32 to vector<1x1xf32>
    %66 = arith.divf %64, %65 : vector<1x1xf32>
    %67 = vector.broadcast %59 : vector<1x1xf32> to vector<1x64xf32>
    %68 = arith.subf %53, %67 : vector<1x64xf32>
    %cst_41 = arith.constant 9.99999974E-6 : f32
    %69 = vector.broadcast %cst_41 : f32 to vector<1x1xf32>
    %70 = arith.addf %66, %69 : vector<1x1xf32>
    %71 = math.rsqrt %70 : vector<1x1xf32>
    %72 = vector.broadcast %71 : vector<1x1xf32> to vector<1x64xf32>
    %73 = arith.mulf %68, %72 : vector<1x64xf32>
    %74 = arith.mulf %54, %73 : vector<1x64xf32>
    %75 = arith.addf %74, %55 : vector<1x64xf32>
    %cst_42 = arith.constant 0.000000e+00 : f32
    %76 = vector.broadcast %cst_42 : f32 to vector<1x64xf32>
    %77 = arith.maximumf %75, %76 : vector<1x64xf32>
    %c0_43 = arith.constant 0 : index
    %c0_44 = arith.constant 0 : index
    %c0_45 = arith.constant 0 : index
    %78 = vector.load %arg13[%c0_43, %c0_44, %c0_45] : memref<1x1x64xf32, #tpu.memory_space<vmem>>, vector<1x1x64xf32>
    %79 = vector.shape_cast %78 : vector<1x1x64xf32> to vector<1x64xf32>
    %80 = vector.shape_cast %77 : vector<1x64xf32> to vector<1x1x64xf32>
    tpu.vector_store %arg13[%c0_43, %c0_44, %c0_45], %80 {strides = array<i32>} : memref<1x1x64xf32, #tpu.memory_space<vmem>>, vector<1x1x64xf32>,
    return
  }
  func.func @transform_0(%arg0: i32, %arg1: memref<2xi32, #tpu.memory_space<smem>>) -> (i32, i32, i32) {
    %c0_i32 = arith.constant 0 : i32
    %c0_i32_0 = arith.constant 0 : i32
    %c0_i32_1 = arith.constant 0 : i32
    return %arg0, %c0_i32, %c0_i32_0 : i32, i32, i32
  }
  func.func @transform_1(%arg0: i32, %arg1: memref<2xi32, #tpu.memory_space<smem>>) -> (i32, i32, i32) {
    %c0_i32 = arith.constant 0 : i32
    %c0_i32_0 = arith.constant 0 : i32
    %c0_i32_1 = arith.constant 0 : i32
    return %arg0, %c0_i32, %c0_i32_0 : i32, i32, i32
  }
  func.func @transform_2(%arg0: i32, %arg1: memref<2xi32, #tpu.memory_space<smem>>) -> (i32, i32, i32) {
    %c0_i32 = arith.constant 0 : i32
    %c0_i32_0 = arith.constant 0 : i32
    %c0_i32_1 = arith.constant 0 : i32
    return %arg0, %c0_i32, %c0_i32_0 : i32, i32, i32
  }
  func.func @transform_3(%arg0: i32, %arg1: memref<2xi32, #tpu.memory_space<smem>>) -> (i32, i32, i32) {
    %0 = arith.index_cast %arg0 : i32 to index
    %1 = memref.load %arg1[%0] : memref<2xi32, #tpu.memory_space<smem>>
    %c0_i32 = arith.constant 0 : i32
    %c0_i32_0 = arith.constant 0 : i32
    %c0_i32_1 = arith.constant 0 : i32
    return %1, %c0_i32, %c0_i32_0 : i32, i32, i32
  }
  func.func @transform_4(%arg0: i32, %arg1: memref<2xi32, #tpu.memory_space<smem>>) -> (i32, i32, i32) {
    %0 = arith.index_cast %arg0 : i32 to index
    %1 = memref.load %arg1[%0] : memref<2xi32, #tpu.memory_space<smem>>
    %c0_i32 = arith.constant 0 : i32
    %c0_i32_0 = arith.constant 0 : i32
    %c0_i32_1 = arith.constant 0 : i32
    return %1, %c0_i32, %c0_i32_0 : i32, i32, i32
  }
  func.func @transform_5(%arg0: i32, %arg1: memref<2xi32, #tpu.memory_space<smem>>) -> (i32, i32, i32) {
    %0 = arith.index_cast %arg0 : i32 to index
    %1 = memref.load %arg1[%0] : memref<2xi32, #tpu.memory_space<smem>>
    %c0_i32 = arith.constant 0 : i32
    %c0_i32_0 = arith.constant 0 : i32
    %c0_i32_1 = arith.constant 0 : i32
    return %1, %c0_i32, %c0_i32_0 : i32, i32, i32
  }
  func.func @transform_6(%arg0: i32, %arg1: memref<2xi32, #tpu.memory_space<smem>>) -> (i32, i32) {
    %c0_i32 = arith.constant 0 : i32
    %c0_i32_0 = arith.constant 0 : i32
    %c0_i32_1 = arith.constant 0 : i32
    return %c0_i32, %c0_i32_0 : i32, i32
  }
  func.func @transform_7(%arg0: i32, %arg1: memref<2xi32, #tpu.memory_space<smem>>) -> (i32, i32) {
    %c0_i32 = arith.constant 0 : i32
    %c0_i32_0 = arith.constant 0 : i32
    %c0_i32_1 = arith.constant 0 : i32
    return %c0_i32, %c0_i32_0 : i32, i32
  }
  func.func @transform_8(%arg0: i32, %arg1: memref<2xi32, #tpu.memory_space<smem>>) -> (i32, i32) {
    %c0_i32 = arith.constant 0 : i32
    %c0_i32_0 = arith.constant 0 : i32
    %c0_i32_1 = arith.constant 0 : i32
    return %c0_i32, %c0_i32_0 : i32, i32
  }
  func.func @transform_9(%arg0: i32, %arg1: memref<2xi32, #tpu.memory_space<smem>>) -> (i32, i32) {
    %c0_i32 = arith.constant 0 : i32
    %c0_i32_0 = arith.constant 0 : i32
    %c0_i32_1 = arith.constant 0 : i32
    return %c0_i32, %c0_i32_0 : i32, i32
  }
  func.func @transform_10(%arg0: i32, %arg1: memref<2xi32, #tpu.memory_space<smem>>) -> (i32, i32) {
    %c0_i32 = arith.constant 0 : i32
    %c0_i32_0 = arith.constant 0 : i32
    %c0_i32_1 = arith.constant 0 : i32
    return %c0_i32, %c0_i32_0 : i32, i32
  }
  func.func @transform_11(%arg0: i32, %arg1: memref<2xi32, #tpu.memory_space<smem>>) -> (i32, i32, i32) {
    %c0_i32 = arith.constant 0 : i32
    %c0_i32_0 = arith.constant 0 : i32
    %c0_i32_1 = arith.constant 0 : i32
    return %arg0, %c0_i32, %c0_i32_0 : i32, i32, i32
  }
}

</mosaic_0001>

<llo_original>
// kernel: tpu_custom_call.1
$region0: #{tpu_custom_call.1}
  #allocation0 [shape = 'u32[]', space=smem, size = 0x4, offset = 0x4, fixed_abs, tag = 'smem constant byte address 0x4 - core index']
  #allocation1 [shape = 'u32[144,128]{1,0:T(1,128)}', space=vmem, size = 0x12000, scoped, tag = 'internal scratch']
  #allocation2 [shape = 's32[1]{0}', space=sflag, size = 0x4, scoped, tag = 'scoped memory for tpu_custom_call.1']
  #allocation3 [shape = 'u8[512]{0}', space=smem, size = 0x200, scoped, tag = 'prefetched SMEM operand 0']
  %s0 = inlined_call_operand.hbm [shape: s32[2], index: 0, kind: input, shape index: {}]
  %s1 = inlined_call_operand.hbm [shape: f32[2,8,32], index: 1, kind: input, shape index: {}]
  %s2 = inlined_call_operand.vmem [shape: f32[2,1,8], index: 2, kind: input, shape index: {}]
  %s3 = inlined_call_operand.vmem [shape: f32[2,1,16], index: 3, kind: input, shape index: {}]
  %s4 = inlined_call_operand.hbm [shape: f32[5,32,32], index: 4, kind: input, shape index: {}]
  %s5 = inlined_call_operand.hbm [shape: f32[5,32,32], index: 5, kind: input, shape index: {}]
  %s6 = inlined_call_operand.vmem [shape: f32[5,1,128], index: 6, kind: input, shape index: {}]
  %s7 = inlined_call_operand.hbm [shape: f32[32,64], index: 7, kind: input, shape index: {}]
  %s8 = inlined_call_operand.vmem [shape: f32[16,64], index: 8, kind: input, shape index: {}]
  %s9 = inlined_call_operand.vmem [shape: f32[1,64], index: 9, kind: input, shape index: {}]
  %s10 = inlined_call_operand.vmem [shape: f32[1,64], index: 10, kind: input, shape index: {}]
  %s11 = inlined_call_operand.vmem [shape: f32[1,64], index: 11, kind: input, shape index: {}]
  %s12 = inlined_call_operand.hbm [shape: f32[2,1,64], index: 12, kind: output, shape index: {}]
  %s13 = sld [smem:[#allocation0]]
  $region93: #{tpu_custom_call.1} parent=0
    _
  %s15 = ssub.s32 1, %s13
  %s16 = scalar_select 0, %s15, %s13
  %18 = dma.hbm_to_smem %s0, 16, [#allocation3], [#allocation2]
  %19 = dma.done [#allocation2], 16
  %20 = sfence
  $region1: #{tpu_custom_call.1} parent=0
    #allocation4 [shape = 'u8[8192]{0}', space=vmem, size = 0x2000, scoped, tag = 'input window, operand 1']
    #allocation5 [shape = 's32[2]{0}', space=sflag, size = 0x8, scoped, tag = 'scoped memory for tpu_custom_call.1']
    #allocation6 [shape = 's32[2]{0}', space=sflag, size = 0x8, scoped, tag = 'scoped memory for tpu_custom_call.1']
    #allocation7 [shape = 'u8[32768]{0}', space=vmem, size = 0x8000, scoped, tag = 'input window, operand 4']
    #allocation8 [shape = 's32[2]{0}', space=sflag, size = 0x8, scoped, tag = 'scoped memory for tpu_custom_call.1']
    #allocation9 [shape = 'u8[32768]{0}', space=vmem, size = 0x8000, scoped, tag = 'input window, operand 5']
    #allocation10 [shape = 'u8[16384]{0}', space=vmem, size = 0x4000, scoped, tag = 'input window, operand 7, single buffered']
    #allocation11 [shape = 's32[1]{0}', space=sflag, size = 0x4, scoped, tag = 'scoped memory for tpu_custom_call.1']
    #allocation12 [shape = 'u8[1024]{0}', space=vmem, size = 0x400, scoped, tag = 'output window, operand 0']
    %21 = vsyncpa [#allocation5], 0
    %s22 = scalar_lea.sflag [#allocation5], 1
    %23 = vsyncpa %s22, 0
    %24 = vsyncpa [#allocation8], 0
    %s25 = scalar_lea.sflag [#allocation8], 1
    %26 = vsyncpa %s25, 0
    %27 = vsyncpa [#allocation11], 0
    %28 = vsyncpa [#allocation6], 0
    %s29 = scalar_lea.sflag [#allocation6], 1
    %30 = vsyncpa %s29, 0
    loop: start=0, step=1, limit=4
    $region2: #{tpu_custom_call.1} parent=1 // loop_pre_header
      _
    $region3: #{tpu_custom_call.1} parent=1 // loop_header
      %s32 = sphi 0, %s36
      %p33 = scmp.ge.s32.totalorder %s32, 4
      %s42 = sphi 0, %s44
      %s45 = sphi 0, %s42
      %s46 = sphi 0, %s45
      %s62 = sphi 0, %s46
      %s68 = sphi 0, %s70
      %s71 = sphi 0, %s68
      %s72 = sphi 0, %s71
      %s88 = sphi 0, %s72
      %s94 = sphi 0, %s96
      %s97 = sphi 0, %s94
      %s98 = sphi 0, %s97
      %s114 = sphi 0, %s98
      %s122 = sphi 0, %s124
      %s125 = sphi 0, %s122
      %s126 = sphi 0, %s125
      %s142 = sphi 0, %s126
      %s150 = sphi 0, %s152
      %s153 = sphi 0, %s150
      %s154 = sphi 0, %s153
      %s170 = sphi 0, %s154
      %s178 = sphi 0, %s180
      %s181 = sphi 0, %s178
      %s182 = sphi 0, %s181
      %s198 = sphi 0, %s182
      %s202 = sphi 0, %s202
      %s204 = sphi 0, %s202
      %s205 = sphi 0, %s204
      %s219 = sphi 0, %s205
      %s223 = sphi 0, %s223
      %s225 = sphi 0, %s223
      %s226 = sphi 0, %s225
      %s240 = sphi 0, %s226
      %s244 = sphi 0, %s244
      %s246 = sphi 0, %s244
      %s247 = sphi 0, %s246
      %s261 = sphi 0, %s247
      %s265 = sphi 0, %s265
      %s267 = sphi 0, %s265
      %s268 = sphi 0, %s267
      %s282 = sphi 0, %s268
      %s286 = sphi 0, %s286
      %s288 = sphi 0, %s286
      %s289 = sphi 0, %s288
      %s303 = sphi 0, %s289
      %s309 = sphi 0, %s311
      %s312 = sphi 0, %s309
      %s313 = sphi 0, %s312
      %s329 = sphi 0, %s313
    $region4: #{tpu_custom_call.1} parent=1 // loop_header_branch
      %35 = sbr.rel (%p33) target = $region8
    $region5: #{tpu_custom_call.1} parent=1 // loop_body
      %s37 = ssub.s32 %s32, 1
      %s38 = ssub.s32 %s32, 2
      %s39 = sadd.s32 %s32, 1
      %s40 = ssub.s32 %s32, %s39
      %p41 = scmp.eq.s32.totalorder %s40, 0
      %s43 = sadd.s32 %s42, 1
      %s44 = scalar_select %p41, %s42, %s43
      %p47 = pneg %p41
      %p48 = scmp.eq.s32.totalorder %s32, 1
      %p49 = por %p47, %p48
      %p50 = scmp.ne.s32.totalorder %s42, %s45
      %p51 = scmp.eq.s32.totalorder %s32, 0
      %p52 = por %p50, %p51
      %p53 = scmp.ne.s32.totalorder %s42, %s45
      %p54 = scmp.eq.s32.totalorder %s37, 1
      %p55 = por %p53, %p54
      %p56 = scmp.ne.s32.totalorder %s45, %s46
      %p57 = scmp.eq.s32.totalorder %s37, 0
      %p58 = por %p56, %p57
      %p59 = scmp.ne.s32.totalorder %s45, %s46
      %p60 = scmp.eq.s32.totalorder %s38, 1
      %p61 = por %p59, %p60
      %p63 = scmp.ne.s32.totalorder %s46, %s62
      %p64 = scmp.eq.s32.totalorder %s38, 0
      %p65 = por %p63, %p64
      %s66 = ssub.s32 %s32, %s39
      %p67 = scmp.eq.s32.totalorder %s66, 0
      %s69 = sadd.s32 %s68, 1
      %s70 = scalar_select %p67, %s68, %s69
      %p73 = pneg %p67
      %p74 = scmp.eq.s32.totalorder %s32, 1
      %p75 = por %p73, %p74
      %p76 = scmp.ne.s32.totalorder %s68, %s71
      %p77 = scmp.eq.s32.totalorder %s32, 0
      %p78 = por %p76, %p77
      %p79 = scmp.ne.s32.totalorder %s68, %s71
      %p80 = scmp.eq.s32.totalorder %s37, 1
      %p81 = por %p79, %p80
      %p82 = scmp.ne.s32.totalorder %s71, %s72
      %p83 = scmp.eq.s32.totalorder %s37, 0
      %p84 = por %p82, %p83
      %p85 = scmp.ne.s32.totalorder %s71, %s72
      %p86 = scmp.eq.s32.totalorder %s38, 1
      %p87 = por %p85, %p86
      %p89 = scmp.ne.s32.totalorder %s72, %s88
      %p90 = scmp.eq.s32.totalorder %s38, 0
      %p91 = por %p89, %p90
      %s92 = ssub.s32 %s32, %s39
      %p93 = scmp.eq.s32.totalorder %s92, 0
      %s95 = sadd.s32 %s94, 1
      %s96 = scalar_select %p93, %s94, %s95
      %p99 = pneg %p93
      %p100 = scmp.eq.s32.totalorder %s32, 1
      %p101 = por %p99, %p100
      %p102 = scmp.ne.s32.totalorder %s94, %s97
      %p103 = scmp.eq.s32.totalorder %s32, 0
      %p104 = por %p102, %p103
      %p105 = scmp.ne.s32.totalorder %s94, %s97
      %p106 = scmp.eq.s32.totalorder %s37, 1
      %p107 = por %p105, %p106
      %p108 = scmp.ne.s32.totalorder %s97, %s98
      %p109 = scmp.eq.s32.totalorder %s37, 0
      %p110 = por %p108, %p109
      %p111 = scmp.ne.s32.totalorder %s97, %s98
      %p112 = scmp.eq.s32.totalorder %s38, 1
      %p113 = por %p111, %p112
      %p115 = scmp.ne.s32.totalorder %s98, %s114
      %p116 = scmp.eq.s32.totalorder %s38, 0
      %p117 = por %p115, %p116
      %s118 = sld [smem:[#allocation3 + %s32]]
      %s119 = sld [smem:[#allocation3 + %s39]]
      %s120 = ssub.s32 %s118, %s119
      %p121 = scmp.eq.s32.totalorder %s120, 0
      %s123 = sadd.s32 %s122, 1
      %s124 = scalar_select %p121, %s122, %s123
      %p127 = pneg %p121
      %p128 = scmp.eq.s32.totalorder %s32, 1
      %p129 = por %p127, %p128
      %p130 = scmp.ne.s32.totalorder %s122, %s125
      %p131 = scmp.eq.s32.totalorder %s32, 0
      %p132 = por %p130, %p131
      %p133 = scmp.ne.s32.totalorder %s122, %s125
      %p134 = scmp.eq.s32.totalorder %s37, 1
      %p135 = por %p133, %p134
      %p136 = scmp.ne.s32.totalorder %s125, %s126
      %p137 = scmp.eq.s32.totalorder %s37, 0
      %p138 = por %p136, %p137
      %p139 = scmp.ne.s32.totalorder %s125, %s126
      %p140 = scmp.eq.s32.totalorder %s38, 1
      %p141 = por %p139, %p140
      %p143 = scmp.ne.s32.totalorder %s126, %s142
      %p144 = scmp.eq.s32.totalorder %s38, 0
      %p145 = por %p143, %p144
      %s146 = sld [smem:[#allocation3 + %s32]]
      %s147 = sld [smem:[#allocation3 + %s39]]
      %s148 = ssub.s32 %s146, %s147
      %p149 = scmp.eq.s32.totalorder %s148, 0
      %s151 = sadd.s32 %s150, 1
      %s152 = scalar_select %p149, %s150, %s151
      %p155 = pneg %p149
      %p156 = scmp.eq.s32.totalorder %s32, 1
      %p157 = por %p155, %p156
      %p158 = scmp.ne.s32.totalorder %s150, %s153
      %p159 = scmp.eq.s32.totalorder %s32, 0
      %p160 = por %p158, %p159
      %p161 = scmp.ne.s32.totalorder %s150, %s153
      %p162 = scmp.eq.s32.totalorder %s37, 1
      %p163 = por %p161, %p162
      %p164 = scmp.ne.s32.totalorder %s153, %s154
      %p165 = scmp.eq.s32.totalorder %s37, 0
      %p166 = por %p164, %p165
      %p167 = scmp.ne.s32.totalorder %s153, %s154
      %p168 = scmp.eq.s32.totalorder %s38, 1
      %p169 = por %p167, %p168
      %p171 = scmp.ne.s32.totalorder %s154, %s170
      %p172 = scmp.eq.s32.totalorder %s38, 0
      %p173 = por %p171, %p172
      %s174 = sld [smem:[#allocation3 + %s32]]
      %s175 = sld [smem:[#allocation3 + %s39]]
      %s176 = ssub.s32 %s174, %s175
      %p177 = scmp.eq.s32.totalorder %s176, 0
      %s179 = sadd.s32 %s178, 1
      %s180 = scalar_select %p177, %s178, %s179
      %p183 = pneg %p177
      %p184 = scmp.eq.s32.totalorder %s32, 1
      %p185 = por %p183, %p184
      %p186 = scmp.ne.s32.totalorder %s178, %s181
      %p187 = scmp.eq.s32.totalorder %s32, 0
      %p188 = por %p186, %p187
      %p189 = scmp.ne.s32.totalorder %s178, %s181
      %p190 = scmp.eq.s32.totalorder %s37, 1
      %p191 = por %p189, %p190
      %p192 = scmp.ne.s32.totalorder %s181, %s182
      %p193 = scmp.eq.s32.totalorder %s37, 0
      %p194 = por %p192, %p193
      %p195 = scmp.ne.s32.totalorder %s181, %s182
      %p196 = scmp.eq.s32.totalorder %s38, 1
      %p197 = por %p195, %p196
      %p199 = scmp.ne.s32.totalorder %s182, %s198
      %p200 = scmp.eq.s32.totalorder %s38, 0
      %p201 = por %p199, %p200
      %s203 = sadd.s32 %s202, 1
      %p206 = scmp.eq.s32.totalorder %s32, 1
      %p207 = scmp.ne.s32.totalorder %s202, %s204
      %p208 = scmp.eq.s32.totalorder %s32, 0
      %p209 = por %p207, %p208
      %p210 = scmp.ne.s32.totalorder %s202, %s204
      %p211 = scmp.eq.s32.totalorder %s37, 1
      %p212 = por %p210, %p211
      %p213 = scmp.ne.s32.totalorder %s204, %s205
      %p214 = scmp.eq.s32.totalorder %s37, 0
      %p215 = por %p213, %p214
      %p216 = scmp.ne.s32.totalorder %s204, %s205
      %p217 = scmp.eq.s32.totalorder %s38, 1
      %p218 = por %p216, %p217
      %p220 = scmp.ne.s32.totalorder %s205, %s219
      %p221 = scmp.eq.s32.totalorder %s38, 0
      %p222 = por %p220, %p221
      %s224 = sadd.s32 %s223, 1
      %p227 = scmp.eq.s32.totalorder %s32, 1
      %p228 = scmp.ne.s32.totalorder %s223, %s225
      %p229 = scmp.eq.s32.totalorder %s32, 0
      %p230 = por %p228, %p229
      %p231 = scmp.ne.s32.totalorder %s223, %s225
      %p232 = scmp.eq.s32.totalorder %s37, 1
      %p233 = por %p231, %p232
      %p234 = scmp.ne.s32.totalorder %s225, %s226
      %p235 = scmp.eq.s32.totalorder %s37, 0
      %p236 = por %p234, %p235
      %p237 = scmp.ne.s32.totalorder %s225, %s226
      %p238 = scmp.eq.s32.totalorder %s38, 1
      %p239 = por %p237, %p238
      %p241 = scmp.ne.s32.totalorder %s226, %s240
      %p242 = scmp.eq.s32.totalorder %s38, 0
      %p243 = por %p241, %p242
      %s245 = sadd.s32 %s244, 1
      %p248 = scmp.eq.s32.totalorder %s32, 1
      %p249 = scmp.ne.s32.totalorder %s244, %s246
      %p250 = scmp.eq.s32.totalorder %s32, 0
      %p251 = por %p249, %p250
      %p252 = scmp.ne.s32.totalorder %s244, %s246
      %p253 = scmp.eq.s32.totalorder %s37, 1
      %p254 = por %p252, %p253
      %p255 = scmp.ne.s32.totalorder %s246, %s247
      %p256 = scmp.eq.s32.totalorder %s37, 0
      %p257 = por %p255, %p256
      %p258 = scmp.ne.s32.totalorder %s246, %s247
      %p259 = scmp.eq.s32.totalorder %s38, 1
      %p260 = por %p258, %p259
      %p262 = scmp.ne.s32.totalorder %s247, %s261
      %p263 = scmp.eq.s32.totalorder %s38, 0
      %p264 = por %p262, %p263
      %s266 = sadd.s32 %s265, 1
      %p269 = scmp.eq.s32.totalorder %s32, 1
      %p270 = scmp.ne.s32.totalorder %s265, %s267
      %p271 = scmp.eq.s32.totalorder %s32, 0
      %p272 = por %p270, %p271
      %p273 = scmp.ne.s32.totalorder %s265, %s267
      %p274 = scmp.eq.s32.totalorder %s37, 1
      %p275 = por %p273, %p274
      %p276 = scmp.ne.s32.totalorder %s267, %s268
      %p277 = scmp.eq.s32.totalorder %s37, 0
      %p278 = por %p276, %p277
      %p279 = scmp.ne.s32.totalorder %s267, %s268
      %p280 = scmp.eq.s32.totalorder %s38, 1
      %p281 = por %p279, %p280
      %p283 = scmp.ne.s32.totalorder %s268, %s282
      %p284 = scmp.eq.s32.totalorder %s38, 0
      %p285 = por %p283, %p284
      %s287 = sadd.s32 %s286, 1
      %p290 = scmp.eq.s32.totalorder %s32, 1
      %p291 = scmp.ne.s32.totalorder %s286, %s288
      %p292 = scmp.eq.s32.totalorder %s32, 0
      %p293 = por %p291, %p292
      %p294 = scmp.ne.s32.totalorder %s286, %s288
      %p295 = scmp.eq.s32.totalorder %s37, 1
      %p296 = por %p294, %p295
      %p297 = scmp.ne.s32.totalorder %s288, %s289
      %p298 = scmp.eq.s32.totalorder %s37, 0
      %p299 = por %p297, %p298
      %p300 = scmp.ne.s32.totalorder %s288, %s289
      %p301 = scmp.eq.s32.totalorder %s38, 1
      %p302 = por %p300, %p301
      %p304 = scmp.ne.s32.totalorder %s289, %s303
      %p305 = scmp.eq.s32.totalorder %s38, 0
      %p306 = por %p304, %p305
      %s307 = ssub.s32 %s32, %s39
      %p308 = scmp.eq.s32.totalorder %s307, 0
      %s310 = sadd.s32 %s309, 1
      %s311 = scalar_select %p308, %s309, %s310
      %p314 = pneg %p308
      %p315 = scmp.eq.s32.totalorder %s32, 1
      %p316 = por %p314, %p315
      %p317 = scmp.ne.s32.totalorder %s309, %s312
      %p318 = scmp.eq.s32.totalorder %s32, 0
      %p319 = por %p317, %p318
      %p320 = scmp.ne.s32.totalorder %s309, %s312
      %p321 = scmp.eq.s32.totalorder %s37, 1
      %p322 = por %p320, %p321
      %p323 = scmp.ne.s32.totalorder %s312, %s313
      %p324 = scmp.eq.s32.totalorder %s37, 0
      %p325 = por %p323, %p324
      %p326 = scmp.ne.s32.totalorder %s312, %s313
      %p327 = scmp.eq.s32.totalorder %s38, 1
      %p328 = por %p326, %p327
      %p330 = scmp.ne.s32.totalorder %s313, %s329
      %p331 = scmp.eq.s32.totalorder %s38, 0
      %p332 = por %p330, %p331
      %p333 = scmp.le.s32.totalorder 1, %s32
      %p334 = scmp.lt.s32.totalorder %s32, 3
      %p335 = pnand %p333, %p334
      %p336 = pneg %p335
      // Predicated region
      $region9: #{tpu_custom_call.1} parent=5 // pred_check
        _
      $region10: #{tpu_custom_call.1} parent=5 // pred_check_branch
        %338 = sbr.rel (%p335) target = $region12
      $region11: #{tpu_custom_call.1} parent=5 // pred_region
        %s339 = ssub.s32 %s32, 1
        // Predicated region
        $region13: #{tpu_custom_call.1} parent=11 // pred_check
          %p340 = pneg %p215
        $region14: #{tpu_custom_call.1} parent=11 // pred_check_branch
          %342 = sbr.rel (%p340) target = $region16
        $region15: #{tpu_custom_call.1} parent=11 // pred_region
          %s344 = ssub.s32 512, 512
          %345 = vsyncadd [#allocation11], %s344
          %s346 = sshll.u32 [#allocation10], 4
          %s347 = int_to_ptr.vmem [resolvable:$true] %s346
          %352 = dma.hbm_to_vmem [thread:$0]  %s7, 512, %s347, [#allocation11], 128, 128, 8
        $region16: #{tpu_custom_call.1} parent=11 // pred_fallthru
          _
        // Predicated region
        $region17: #{tpu_custom_call.1} parent=11 // pred_check
          %p353 = pneg %p236
        $region18: #{tpu_custom_call.1} parent=11 // pred_check_branch
          %355 = sbr.rel (%p353) target = $region20
        $region19: #{tpu_custom_call.1} parent=11 // pred_region
          _
        $region20: #{tpu_custom_call.1} parent=11 // pred_fallthru
          _
        // Predicated region
        $region21: #{tpu_custom_call.1} parent=11 // pred_check
          %p356 = pneg %p257
        $region22: #{tpu_custom_call.1} parent=11 // pred_check_branch
          %358 = sbr.rel (%p356) target = $region24
        $region23: #{tpu_custom_call.1} parent=11 // pred_region
          _
        $region24: #{tpu_custom_call.1} parent=11 // pred_fallthru
          _
        // Predicated region
        $region25: #{tpu_custom_call.1} parent=11 // pred_check
          %p359 = pneg %p278
        $region26: #{tpu_custom_call.1} parent=11 // pred_check_branch
          %361 = sbr.rel (%p359) target = $region28
        $region27: #{tpu_custom_call.1} parent=11 // pred_region
          _
        $region28: #{tpu_custom_call.1} parent=11 // pred_fallthru
          _
        // Predicated region
        $region29: #{tpu_custom_call.1} parent=11 // pred_check
          %p362 = pneg %p299
        $region30: #{tpu_custom_call.1} parent=11 // pred_check_branch
          %364 = sbr.rel (%p362) target = $region32
        $region31: #{tpu_custom_call.1} parent=11 // pred_region
          _
        $region32: #{tpu_custom_call.1} parent=11 // pred_fallthru
          _
      $region12: #{tpu_custom_call.1} parent=5 // pred_fallthru
        _
      %p365 = scmp.lt.s32.totalorder %s32, 2
      // Predicated region
      $region33: #{tpu_custom_call.1} parent=5 // pred_check
        %p366 = pneg %p365
      $region34: #{tpu_custom_call.1} parent=5 // pred_check_branch
        %368 = sbr.rel (%p366) target = $region36
      $region35: #{tpu_custom_call.1} parent=5 // pred_region
        // Predicated region
        $region37: #{tpu_custom_call.1} parent=35 // pred_check
          %p369 = pneg %p52
        $region38: #{tpu_custom_call.1} parent=35 // pred_check_branch
          %371 = sbr.rel (%p369) target = $region40
        $region39: #{tpu_custom_call.1} parent=35 // pred_region
          %s372 = sand.u32 %s42, 1
          %s373 = scalar_lea.sflag [#allocation5], %s372
          %s374 = sand.u32 %s42, 1
          %s375 = smul.addr %s374, 8
          %s376 = scalar_lea.vmem [#allocation4], %s375
          %s378 = ssub.s32 128, 128
          %379 = vsyncadd %s373, %s378
          %s380 = smul.addr %s32, 128
          %s381 = scalar_lea.hbm %s1, %s380
          %s383 = sshll.u32 %s376, 4
          %s384 = int_to_ptr.vmem [resolvable:$true] %s383
          %386 = dma.hbm_to_vmem [thread:$0]  %s381, 128, %s384, %s373
        $region40: #{tpu_custom_call.1} parent=35 // pred_fallthru
          _
        // Predicated region
        $region41: #{tpu_custom_call.1} parent=35 // pred_check
          %p387 = pneg %p78
        $region42: #{tpu_custom_call.1} parent=35 // pred_check_branch
          %389 = sbr.rel (%p387) target = $region44
        $region43: #{tpu_custom_call.1} parent=35 // pred_region
          %p390 = scmp.lt.s32.totalorder %s32, 1
          %s391 = scalar_select %p390, %s32, 1
          %s392 = scalar_lea.vmem %s2, %s391
        $region44: #{tpu_custom_call.1} parent=35 // pred_fallthru
          _
        // Predicated region
        $region45: #{tpu_custom_call.1} parent=35 // pred_check
          %p393 = pneg %p104
        $region46: #{tpu_custom_call.1} parent=35 // pred_check_branch
          %395 = sbr.rel (%p393) target = $region48
        $region47: #{tpu_custom_call.1} parent=35 // pred_region
          %p396 = scmp.lt.s32.totalorder %s32, 1
          %s397 = scalar_select %p396, %s32, 1
          %s398 = scalar_lea.vmem %s3, %s397
        $region48: #{tpu_custom_call.1} parent=35 // pred_fallthru
          _
        // Predicated region
        $region49: #{tpu_custom_call.1} parent=35 // pred_check
          %p399 = pneg %p132
        $region50: #{tpu_custom_call.1} parent=35 // pred_check_branch
          %401 = sbr.rel (%p399) target = $region52
        $region51: #{tpu_custom_call.1} parent=35 // pred_region
          %s402 = sand.u32 %s32, 1
          %s403 = scalar_lea.sflag [#allocation8], %s402
          %s404 = sand.u32 %s122, 1
          %s405 = smul.addr %s404, 32
          %s406 = scalar_lea.vmem [#allocation7], %s405
          %s407 = sld [smem:[#allocation3 + %s32]]
          %s409 = ssub.s32 512, 512
          %410 = vsyncadd %s403, %s409
          %s411 = smul.addr %s407, 4
          %s412 = smul.addr %s411, 128
          %s413 = scalar_lea.hbm %s4, %s412
          %s414 = sshll.u32 %s406, 4
          %s415 = int_to_ptr.vmem [resolvable:$true] %s414
          %420 = dma.hbm_to_vmem [thread:$0]  %s413, 512, %s415, %s403, 128, 128, 8
        $region52: #{tpu_custom_call.1} parent=35 // pred_fallthru
          _
        // Predicated region
        $region53: #{tpu_custom_call.1} parent=35 // pred_check
          %p421 = pneg %p160
        $region54: #{tpu_custom_call.1} parent=35 // pred_check_branch
          %423 = sbr.rel (%p421) target = $region56
        $region55: #{tpu_custom_call.1} parent=35 // pred_region
          %s424 = sand.u32 %s32, 1
          %s425 = scalar_lea.sflag [#allocation8], %s424
          %s426 = sand.u32 %s150, 1
          %s427 = smul.addr %s426, 32
          %s428 = scalar_lea.vmem [#allocation9], %s427
          %s429 = sld [smem:[#allocation3 + %s32]]
          %s431 = ssub.s32 512, 512
          %432 = vsyncadd %s425, %s431
          %s433 = smul.addr %s429, 4
          %s434 = smul.addr %s433, 128
          %s435 = scalar_lea.hbm %s5, %s434
          %s436 = sshll.u32 %s428, 4
          %s437 = int_to_ptr.vmem [resolvable:$true] %s436
          %442 = dma.hbm_to_vmem [thread:$0]  %s435, 512, %s437, %s425, 128, 128, 8
        $region56: #{tpu_custom_call.1} parent=35 // pred_fallthru
          _
        // Predicated region
        $region57: #{tpu_custom_call.1} parent=35 // pred_check
          %p443 = pneg %p188
        $region58: #{tpu_custom_call.1} parent=35 // pred_check_branch
          %445 = sbr.rel (%p443) target = $region60
        $region59: #{tpu_custom_call.1} parent=35 // pred_region
          %s446 = sld [smem:[#allocation3 + %s32]]
          %p447 = scmp.lt.s32.totalorder %s446, 4
          %s448 = scalar_select %p447, %s446, 4
          %s449 = scalar_lea.vmem %s6, %s448
          %s450 = sld [smem:[#allocation3 + %s32]]
        $region60: #{tpu_custom_call.1} parent=35 // pred_fallthru
          _
      $region36: #{tpu_custom_call.1} parent=5 // pred_fallthru
        _
      %p451 = scmp.le.s32.totalorder 1, %s32
      %p452 = scmp.lt.s32.totalorder %s32, 3
      %p453 = pnand %p451, %p452
      %p454 = pneg %p453
      // Predicated region
      $region61: #{tpu_custom_call.1} parent=5 // pred_check
        _
      $region62: #{tpu_custom_call.1} parent=5 // pred_check_branch
        %456 = sbr.rel (%p453) target = $region64
      $region63: #{tpu_custom_call.1} parent=5 // pred_region
        %s457 = ssub.s32 %s32, 1
        %s458 = sand.u32 %s45, 1
        %s459 = scalar_lea.sflag [#allocation5], %s458
        %s460 = sand.u32 %s45, 1
        %s461 = smul.addr %s460, 8
        %s462 = scalar_lea.vmem [#allocation4], %s461
        // Predicated region
        $region65: #{tpu_custom_call.1} parent=63 // pred_check
          %p463 = pneg %p58
        $region66: #{tpu_custom_call.1} parent=63 // pred_check_branch
          %465 = sbr.rel (%p463) target = $region68
        $region67: #{tpu_custom_call.1} parent=63 // pred_region
          %466 = dma.done %s459, 128
        $region68: #{tpu_custom_call.1} parent=63 // pred_fallthru
          _
        %s467 = sand.u32 %s37, 1
        %s468 = scalar_lea.sflag [#allocation8], %s467
        %s469 = sand.u32 %s125, 1
        %s470 = smul.addr %s469, 32
        %s471 = scalar_lea.vmem [#allocation7], %s470
        // Predicated region
        $region69: #{tpu_custom_call.1} parent=63 // pred_check
          %p472 = pneg %p138
        $region70: #{tpu_custom_call.1} parent=63 // pred_check_branch
          %474 = sbr.rel (%p472) target = $region72
        $region71: #{tpu_custom_call.1} parent=63 // pred_region
          %475 = dma.done %s468, 512
        $region72: #{tpu_custom_call.1} parent=63 // pred_fallthru
          _
        %s476 = sand.u32 %s37, 1
        %s477 = scalar_lea.sflag [#allocation8], %s476
        %s478 = sand.u32 %s153, 1
        %s479 = smul.addr %s478, 32
        %s480 = scalar_lea.vmem [#allocation9], %s479
        // Predicated region
        $region73: #{tpu_custom_call.1} parent=63 // pred_check
          %p481 = pneg %p166
        $region74: #{tpu_custom_call.1} parent=63 // pred_check_branch
          %483 = sbr.rel (%p481) target = $region76
        $region75: #{tpu_custom_call.1} parent=63 // pred_region
          %484 = dma.done %s477, 512
        $region76: #{tpu_custom_call.1} parent=63 // pred_fallthru
          _
        // Predicated region
        $region77: #{tpu_custom_call.1} parent=63 // pred_check
          %p485 = pneg %p215
        $region78: #{tpu_custom_call.1} parent=63 // pred_check_branch
          %487 = sbr.rel (%p485) target = $region80
        $region79: #{tpu_custom_call.1} parent=63 // pred_region
          %488 = dma.done [#allocation11], 512
        $region80: #{tpu_custom_call.1} parent=63 // pred_fallthru
          _
        %s489 = sand.u32 %s45, 1
        %s490 = scalar_lea.sflag [#allocation5], %s489
        %s491 = sand.u32 %s45, 1
        %s492 = smul.addr %s491, 8
        %s493 = scalar_lea.vmem [#allocation4], %s492
        %p494 = pneg %p58
        %p495 = pneg %p55
        %p496 = scmp.lt.s32.totalorder %s37, 1
        %s497 = scalar_select %p496, %s37, 1
        %s498 = scalar_lea.vmem %s2, %s497
        %p499 = pneg %p84
        %p500 = pneg %p81
        %p501 = scmp.lt.s32.totalorder %s37, 1
        %s502 = scalar_select %p501, %s37, 1
        %s503 = scalar_lea.vmem %s3, %s502
        %p504 = pneg %p110
        %p505 = pneg %p107
        %s506 = sand.u32 %s37, 1
        %s507 = scalar_lea.sflag [#allocation8], %s506
        %s508 = sand.u32 %s125, 1
        %s509 = smul.addr %s508, 32
        %s510 = scalar_lea.vmem [#allocation7], %s509
        %p511 = pneg %p138
        %p512 = pneg %p135
        %s513 = sand.u32 %s37, 1
        %s514 = scalar_lea.sflag [#allocation8], %s513
        %s515 = sand.u32 %s153, 1
        %s516 = smul.addr %s515, 32
        %s517 = scalar_lea.vmem [#allocation9], %s516
        %p518 = pneg %p166
        %p519 = pneg %p163
        %s520 = sld [smem:[#allocation3 + %s37]]
        %p521 = scmp.lt.s32.totalorder %s520, 4
        %s522 = scalar_select %p521, %s520, 4
        %s523 = scalar_lea.vmem %s6, %s522
        %p524 = pneg %p194
        %p525 = pneg %p191
        %p526 = pneg %p215
        %p527 = pneg %p212
        %p528 = pneg %p236
        %p529 = pneg %p233
        %p530 = pneg %p257
        %p531 = pneg %p254
        %p532 = pneg %p278
        %p533 = pneg %p275
        %p534 = pneg %p299
        %p535 = pneg %p296
        %p536 = pneg %p325
        %p537 = pneg %p322
        %s538 = sand.u32 %s312, 1
        %s539 = scalar_lea.sflag [#allocation6], %s538
        %s540 = sand.u32 %s312, 1
        %s541 = scalar_lea.vmem [#allocation12], %s540
        %p542 = scmp.lt.s32.totalorder %s37, 1
        %s543 = scalar_select %p542, %s37, 1
        %s544 = scalar_lea.vmem %s2, %s543
        %p545 = scmp.lt.s32.totalorder %s37, 1
        %s546 = scalar_select %p545, %s37, 1
        %s547 = scalar_lea.vmem %s3, %s546
        %s548 = sld [smem:[#allocation3 + %s37]]
        %s549 = sld [smem:[#allocation3 + %s37]]
        %s550 = sld [smem:[#allocation3 + %s37]]
        %p551 = scmp.lt.s32.totalorder %s550, 4
        %s552 = scalar_select %p551, %s550, 4
        %s553 = scalar_lea.vmem %s6, %s552
        %s554 = sld [smem:[#allocation3 + %s37]]
        %v555 = vld [vmem:[%s462] sm:$0xff]
        %v556 = vld [vmem:[%s553] sm:$0x1]
        %v557 = vld [vmem:[%s471] sm:$0xff]
        %v558 = vld [vmem:[%s471 + $0x8] sm:$0xff]
        %v559 = vld [vmem:[%s471 + $0x10] sm:$0xff]
        %v560 = vld [vmem:[%s471 + $0x18] sm:$0xff]
        %v562 = vlaneseq
        %v563 = vshrl.u32 %v562, 7
        %v564 = vsub.s32 0, %v563
        %v565 = vrot.slane %v556, %v564
        %vm567 = vcmask 261120
        %v569 = vsel %vm567, %v555, 0
        %571 = vmatprep.subr.mxu0 0.0
        %572 = vmatpush1.msra.mxu0 %v557
        %573 = vmatprep.subr.mxu0 0.0
        %574 = vmatpush1.msra.mxu0 %v558
        %575 = vmatprep.subr.mxu0 0.0
        %576 = vmatpush1.msra.mxu0 %v559
        %577 = vmatprep.subr.mxu0 0.0
        %578 = vmatpush1.msra.mxu0 %v560
        %579 = vmatprep.subr.mxu0 0.0
        %580 = vmatpush1.msra.mxu0 0.0
        %581 = vmatprep.subr.mxu0 0.0
        %582 = vmatpush1.msra.mxu0 0.0
        %583 = vmatprep.subr.mxu0 0.0
        %584 = vmatpush1.msra.mxu0 0.0
        %585 = vmatprep.subr.mxu0 0.0
        %586 = vmatpush1.msra.mxu0 0.0
        %587 = vmatprep.subr.mxu0 0.0
        %588 = vmatpush1.msra.mxu0 0.0
        %589 = vmatprep.subr.mxu0 0.0
        %590 = vmatpush1.msra.mxu0 0.0
        %591 = vmatprep.subr.mxu0 0.0
        %592 = vmatpush1.msra.mxu0 0.0
        %593 = vmatprep.subr.mxu0 0.0
        %594 = vmatpush1.msra.mxu0 0.0
        %595 = vmatprep.subr.mxu0 0.0
        %596 = vmatpush1.msra.mxu0 0.0
        %597 = vmatprep.subr.mxu0 0.0
        %598 = vmatpush1.msra.mxu0 0.0
        %599 = vmatprep.subr.mxu0 0.0
        %600 = vmatpush1.msra.mxu0 0.0
        %601 = vmatprep.subr.mxu0 0.0
        %602 = vmatpush1.msra.mxu0 0.0
        %603 = vmatprep.subr.mxu0 0.0
        %604 = vmatpush1.msra.mxu0 0.0
        %605 = vmatprep.subr.mxu0 0.0
        %606 = vmatpush1.msra.mxu0 0.0
        %607 = vmatprep.subr.mxu0 0.0
        %608 = vmatpush1.msra.mxu0 0.0
        %609 = vmatprep.subr.mxu0 0.0
        %610 = vmatpush1.msra.mxu0 0.0
        %611 = vmatprep.subr.mxu0 0.0
        %612 = vmatpush1.msra.mxu0 0.0
        %613 = vmatprep.subr.mxu0 0.0
        %614 = vmatpush1.msra.mxu0 0.0
        %615 = vmatprep.subr.mxu0 0.0
        %616 = vmatpush1.msra.mxu0 0.0
        %617 = vmatprep.subr.mxu0 0.0
        %618 = vmatpush1.msra.mxu0 0.0
        %619 = vmatprep.subr.mxu0 0.0
        %620 = vmatpush1.msra.mxu0 0.0
        %621 = vmatprep.subr.mxu0 0.0
        %622 = vmatpush1.msra.mxu0 0.0
        %623 = vmatprep.subr.mxu0 0.0
        %624 = vmatpush1.msra.mxu0 0.0
        %625 = vmatprep.subr.mxu0 0.0
        %626 = vmatpush1.msra.mxu0 0.0
        %627 = vmatprep.subr.mxu0 0.0
        %628 = vmatpush1.msra.mxu0 0.0
        %629 = vmatprep.subr.mxu0 0.0
        %630 = vmatpush1.msra.mxu0 0.0
        %631 = vmatprep.subr.mxu0 0.0
        %632 = vmatpush1.msra.mxu0 0.0
        %633 = vmatprep.subr.mxu0 0.0
        %634 = vmatpush1.msra.mxu0 0.0
        %635 = vmatprep.mubr.f32.mxu0 0.0
        %636 = vmatmul.mubr.f32.gmra.mrb[0].mxu0 %v569
        %v637 = vpop.f32.mrb[0].mxu0
        %v638 = vadd.f32 %v565, %v637
        %v639 = vpop.f32.mrb[0].mxu0
        %640 = vdwg.mxu0
        %v641 = vsel %vm567, %v638, 0.0
        %642 = vadd.xlane.f32.xlu0 %v641
        %v643 = vpop.xlane.xlu0 %642
        %v644 = vrcp.pop 32.0
        %v645 = vmul.f32 %v643, %v644
        %v646 = vsub.f32 %v638, %v645
        %v647 = vmul.f32 %v646, %v646
        %v648 = vsel %vm567, %v647, 0.0
        %649 = vadd.xlane.f32.xlu0 %v648
        %v650 = vpop.xlane.xlu0 %649
        %v651 = vmul.f32 %v650, %v644
        %v652 = vadd.f32 %v651, 1e-05
        %v653 = vrsqrt.pop %v652
        %v654 = vmul.f32 %v646, %v653
        %656 = vrot.lane.b32.xlu0 %v654, 32
        %v657 = vpop.permute.xlu0 %656
        %v659 = vmul.f32 %v565, %v657
        %660 = vrot.lane.b32.xlu0 %v565, 96
        %v661 = vpop.permute.xlu0 %660
        %v663 = vadd.f32 %v659, %v661
        %v664 = vmax.f32 %v663, 0.0
        %v665 = vld [vmem:[%s480] sm:$0xff]
        %v666 = vld [vmem:[%s480 + $0x8] sm:$0xff]
        %v667 = vld [vmem:[%s480 + $0x10] sm:$0xff]
        %v668 = vld [vmem:[%s480 + $0x18] sm:$0xff]
        %670 = vrot.lane.b32.xlu0 %v664, 96
        %v671 = vpop.permute.xlu0 %670
        %672 = vrot.lane.b32.xlu0 %v565, 32
        %v673 = vpop.permute.xlu0 %672
        %v675 = vsel %vm567, %v671, 0
        %677 = vmatprep.subr.mxu0 0.0
        %678 = vmatpush1.msra.mxu0 %v665
        %679 = vmatprep.subr.mxu0 0.0
        %680 = vmatpush1.msra.mxu0 %v666
        %681 = vmatprep.subr.mxu0 0.0
        %682 = vmatpush1.msra.mxu0 %v667
        %683 = vmatprep.subr.mxu0 0.0
        %684 = vmatpush1.msra.mxu0 %v668
        %685 = vmatprep.subr.mxu0 0.0
        %686 = vmatpush1.msra.mxu0 0.0
        %687 = vmatprep.subr.mxu0 0.0
        %688 = vmatpush1.msra.mxu0 0.0
        %689 = vmatprep.subr.mxu0 0.0
        %690 = vmatpush1.msra.mxu0 0.0
        %691 = vmatprep.subr.mxu0 0.0
        %692 = vmatpush1.msra.mxu0 0.0
        %693 = vmatprep.subr.mxu0 0.0
        %694 = vmatpush1.msra.mxu0 0.0
        %695 = vmatprep.subr.mxu0 0.0
        %696 = vmatpush1.msra.mxu0 0.0
        %697 = vmatprep.subr.mxu0 0.0
        %698 = vmatpush1.msra.mxu0 0.0
        %699 = vmatprep.subr.mxu0 0.0
        %700 = vmatpush1.msra.mxu0 0.0
        %701 = vmatprep.subr.mxu0 0.0
        %702 = vmatpush1.msra.mxu0 0.0
        %703 = vmatprep.subr.mxu0 0.0
        %704 = vmatpush1.msra.mxu0 0.0
        %705 = vmatprep.subr.mxu0 0.0
        %706 = vmatpush1.msra.mxu0 0.0
        %707 = vmatprep.subr.mxu0 0.0
        %708 = vmatpush1.msra.mxu0 0.0
        %709 = vmatprep.subr.mxu0 0.0
        %710 = vmatpush1.msra.mxu0 0.0
        %711 = vmatprep.subr.mxu0 0.0
        %712 = vmatpush1.msra.mxu0 0.0
        %713 = vmatprep.subr.mxu0 0.0
        %714 = vmatpush1.msra.mxu0 0.0
        %715 = vmatprep.subr.mxu0 0.0
        %716 = vmatpush1.msra.mxu0 0.0
        %717 = vmatprep.subr.mxu0 0.0
        %718 = vmatpush1.msra.mxu0 0.0
        %719 = vmatprep.subr.mxu0 0.0
        %720 = vmatpush1.msra.mxu0 0.0
        %721 = vmatprep.subr.mxu0 0.0
        %722 = vmatpush1.msra.mxu0 0.0
        %723 = vmatprep.subr.mxu0 0.0
        %724 = vmatpush1.msra.mxu0 0.0
        %725 = vmatprep.subr.mxu0 0.0
        %726 = vmatpush1.msra.mxu0 0.0
        %727 = vmatprep.subr.mxu0 0.0
        %728 = vmatpush1.msra.mxu0 0.0
        %729 = vmatprep.subr.mxu0 0.0
        %730 = vmatpush1.msra.mxu0 0.0
        %731 = vmatprep.subr.mxu0 0.0
        %732 = vmatpush1.msra.mxu0 0.0
        %733 = vmatprep.subr.mxu0 0.0
        %734 = vmatpush1.msra.mxu0 0.0
        %735 = vmatprep.subr.mxu0 0.0
        %736 = vmatpush1.msra.mxu0 0.0
        %737 = vmatprep.subr.mxu0 0.0
        %738 = vmatpush1.msra.mxu0 0.0
        %739 = vmatprep.subr.mxu0 0.0
        %740 = vmatpush1.msra.mxu0 0.0
        %741 = vmatprep.mubr.f32.mxu0 0.0
        %742 = vmatmul.mubr.f32.gmra.mrb[0].mxu0 %v675
        %v743 = vpop.f32.mrb[0].mxu0
        %v744 = vadd.f32 %v673, %v743
        %v745 = vpop.f32.mrb[0].mxu0
        %746 = vdwg.mxu0
        %v747 = vld [vmem:[%s544] sm:$0x1]
        %vm748 = vcmask 64512
        %v750 = vsel %vm748, %v747, 0
        %752 = vmatprep.subr.mxu0 0.0
        %753 = vmatpush1.msra.mxu0 %v744
        %754 = vmatprep.subr.mxu0 0.0
        %755 = vmatpush1.msra.mxu0 0.0
        %756 = vmatprep.subr.mxu0 0.0
        %757 = vmatpush1.msra.mxu0 0.0
        %758 = vmatprep.subr.mxu0 0.0
        %759 = vmatpush1.msra.mxu0 0.0
        %760 = vmatprep.subr.mxu0 0.0
        %761 = vmatpush1.msra.mxu0 0.0
        %762 = vmatprep.subr.mxu0 0.0
        %763 = vmatpush1.msra.mxu0 0.0
        %764 = vmatprep.subr.mxu0 0.0
        %765 = vmatpush1.msra.mxu0 0.0
        %766 = vmatprep.subr.mxu0 0.0
        %767 = vmatpush1.msra.mxu0 0.0
        %768 = vmatprep.subr.mxu0 0.0
        %769 = vmatpush1.msra.mxu0 0.0
        %770 = vmatprep.subr.mxu0 0.0
        %771 = vmatpush1.msra.mxu0 0.0
        %772 = vmatprep.subr.mxu0 0.0
        %773 = vmatpush1.msra.mxu0 0.0
        %774 = vmatprep.subr.mxu0 0.0
        %775 = vmatpush1.msra.mxu0 0.0
        %776 = vmatprep.subr.mxu0 0.0
        %777 = vmatpush1.msra.mxu0 0.0
        %778 = vmatprep.subr.mxu0 0.0
        %779 = vmatpush1.msra.mxu0 0.0
        %780 = vmatprep.subr.mxu0 0.0
        %781 = vmatpush1.msra.mxu0 0.0
        %782 = vmatprep.subr.mxu0 0.0
        %783 = vmatpush1.msra.mxu0 0.0
        %784 = vmatprep.subr.mxu0 0.0
        %785 = vmatpush1.msra.mxu0 0.0
        %786 = vmatprep.subr.mxu0 0.0
        %787 = vmatpush1.msra.mxu0 0.0
        %788 = vmatprep.subr.mxu0 0.0
        %789 = vmatpush1.msra.mxu0 0.0
        %790 = vmatprep.subr.mxu0 0.0
        %791 = vmatpush1.msra.mxu0 0.0
        %792 = vmatprep.subr.mxu0 0.0
        %793 = vmatpush1.msra.mxu0 0.0
        %794 = vmatprep.subr.mxu0 0.0
        %795 = vmatpush1.msra.mxu0 0.0
        %796 = vmatprep.subr.mxu0 0.0
        %797 = vmatpush1.msra.mxu0 0.0
        %798 = vmatprep.subr.mxu0 0.0
        %799 = vmatpush1.msra.mxu0 0.0
        %800 = vmatprep.subr.mxu0 0.0
        %801 = vmatpush1.msra.mxu0 0.0
        %802 = vmatprep.subr.mxu0 0.0
        %803 = vmatpush1.msra.mxu0 0.0
        %804 = vmatprep.subr.mxu0 0.0
        %805 = vmatpush1.msra.mxu0 0.0
        %806 = vmatprep.subr.mxu0 0.0
        %807 = vmatpush1.msra.mxu0 0.0
        %808 = vmatprep.subr.mxu0 0.0
        %809 = vmatpush1.msra.mxu0 0.0
        %810 = vmatprep.subr.mxu0 0.0
        %811 = vmatpush1.msra.mxu0 0.0
        %812 = vmatprep.subr.mxu0 0.0
        %813 = vmatpush1.msra.mxu0 0.0
        %814 = vmatprep.subr.mxu0 0.0
        %815 = vmatpush1.msra.mxu0 0.0
        %816 = vmatprep.mubr.f32.mxu0 0.0
        %817 = vmatmul.mubr.f32.gmra.mrb[0].mxu0 %v750
        %v818 = vpop.f32.mrb[0].mxu0
        %v819 = vadd.f32 0.0, %v818
        %v820 = vpop.f32.mrb[0].mxu0
        %821 = vdwg.mxu0
        %v822 = vld [vmem:[%s547] sm:$0x1]
        %v823 = vld [vmem:[#allocation10] sm:$0xff]
        %v824 = vld [vmem:[#allocation10 + $0x8] sm:$0xff]
        %v825 = vld [vmem:[#allocation10 + $0x10] sm:$0xff]
        %v826 = vld [vmem:[#allocation10 + $0x18] sm:$0xff]
        %v827 = vld [vmem:[%s8] sm:$0xff]
        %v828 = vld [vmem:[%s8 + $0x8] sm:$0xff]
        %vm829 = vcmask 130048
        %v831 = vsel %vm829, %v822, 0
        %833 = vmatprep.subr.mxu0 0.0
        %834 = vmatpush1.msra.mxu0 %v827
        %835 = vmatprep.subr.mxu0 0.0
        %836 = vmatpush1.msra.mxu0 %v828
        %837 = vmatprep.subr.mxu0 0.0
        %838 = vmatpush1.msra.mxu0 0.0
        %839 = vmatprep.subr.mxu0 0.0
        %840 = vmatpush1.msra.mxu0 0.0
        %841 = vmatprep.subr.mxu0 0.0
        %842 = vmatpush1.msra.mxu0 0.0
        %843 = vmatprep.subr.mxu0 0.0
        %844 = vmatpush1.msra.mxu0 0.0
        %845 = vmatprep.subr.mxu0 0.0
        %846 = vmatpush1.msra.mxu0 0.0
        %847 = vmatprep.subr.mxu0 0.0
        %848 = vmatpush1.msra.mxu0 0.0
        %849 = vmatprep.subr.mxu0 0.0
        %850 = vmatpush1.msra.mxu0 0.0
        %851 = vmatprep.subr.mxu0 0.0
        %852 = vmatpush1.msra.mxu0 0.0
        %853 = vmatprep.subr.mxu0 0.0
        %854 = vmatpush1.msra.mxu0 0.0
        %855 = vmatprep.subr.mxu0 0.0
        %856 = vmatpush1.msra.mxu0 0.0
        %857 = vmatprep.subr.mxu0 0.0
        %858 = vmatpush1.msra.mxu0 0.0
        %859 = vmatprep.subr.mxu0 0.0
        %860 = vmatpush1.msra.mxu0 0.0
        %861 = vmatprep.subr.mxu0 0.0
        %862 = vmatpush1.msra.mxu0 0.0
        %863 = vmatprep.subr.mxu0 0.0
        %864 = vmatpush1.msra.mxu0 0.0
        %865 = vmatprep.subr.mxu0 0.0
        %866 = vmatpush1.msra.mxu0 0.0
        %867 = vmatprep.subr.mxu0 0.0
        %868 = vmatpush1.msra.mxu0 0.0
        %869 = vmatprep.subr.mxu0 0.0
        %870 = vmatpush1.msra.mxu0 0.0
        %871 = vmatprep.subr.mxu0 0.0
        %872 = vmatpush1.msra.mxu0 0.0
        %873 = vmatprep.subr.mxu0 0.0
        %874 = vmatpush1.msra.mxu0 0.0
        %875 = vmatprep.subr.mxu0 0.0
        %876 = vmatpush1.msra.mxu0 0.0
        %877 = vmatprep.subr.mxu0 0.0
        %878 = vmatpush1.msra.mxu0 0.0
        %879 = vmatprep.subr.mxu0 0.0
        %880 = vmatpush1.msra.mxu0 0.0
        %881 = vmatprep.subr.mxu0 0.0
        %882 = vmatpush1.msra.mxu0 0.0
        %883 = vmatprep.subr.mxu0 0.0
        %884 = vmatpush1.msra.mxu0 0.0
        %885 = vmatprep.subr.mxu0 0.0
        %886 = vmatpush1.msra.mxu0 0.0
        %887 = vmatprep.subr.mxu0 0.0
        %888 = vmatpush1.msra.mxu0 0.0
        %889 = vmatprep.subr.mxu0 0.0
        %890 = vmatpush1.msra.mxu0 0.0
        %891 = vmatprep.subr.mxu0 0.0
        %892 = vmatpush1.msra.mxu0 0.0
        %893 = vmatprep.subr.mxu0 0.0
        %894 = vmatpush1.msra.mxu0 0.0
        %895 = vmatprep.subr.mxu0 0.0
        %896 = vmatpush1.msra.mxu0 0.0
        %897 = vmatprep.mubr.f32.mxu0 0.0
        %898 = vmatmul.mubr.f32.gmra.mrb[0].mxu0 %v831
        %v899 = vpop.f32.mrb[0].mxu0
        %v900 = vadd.f32 0.0, %v899
        %v901 = vpop.f32.mrb[0].mxu0
        %902 = vdwg.mxu0
        %v904 = vsel %vm567, %v819, 0
        %906 = vmatprep.subr.mxu0 0.0
        %907 = vmatpush1.msra.mxu0 %v823
        %908 = vmatprep.subr.mxu0 0.0
        %909 = vmatpush1.msra.mxu0 %v824
        %910 = vmatprep.subr.mxu0 0.0
        %911 = vmatpush1.msra.mxu0 %v825
        %912 = vmatprep.subr.mxu0 0.0
        %913 = vmatpush1.msra.mxu0 %v826
        %914 = vmatprep.subr.mxu0 0.0
        %915 = vmatpush1.msra.mxu0 0.0
        %916 = vmatprep.subr.mxu0 0.0
        %917 = vmatpush1.msra.mxu0 0.0
        %918 = vmatprep.subr.mxu0 0.0
        %919 = vmatpush1.msra.mxu0 0.0
        %920 = vmatprep.subr.mxu0 0.0
        %921 = vmatpush1.msra.mxu0 0.0
        %922 = vmatprep.subr.mxu0 0.0
        %923 = vmatpush1.msra.mxu0 0.0
        %924 = vmatprep.subr.mxu0 0.0
        %925 = vmatpush1.msra.mxu0 0.0
        %926 = vmatprep.subr.mxu0 0.0
        %927 = vmatpush1.msra.mxu0 0.0
        %928 = vmatprep.subr.mxu0 0.0
        %929 = vmatpush1.msra.mxu0 0.0
        %930 = vmatprep.subr.mxu0 0.0
        %931 = vmatpush1.msra.mxu0 0.0
        %932 = vmatprep.subr.mxu0 0.0
        %933 = vmatpush1.msra.mxu0 0.0
        %934 = vmatprep.subr.mxu0 0.0
        %935 = vmatpush1.msra.mxu0 0.0
        %936 = vmatprep.subr.mxu0 0.0
        %937 = vmatpush1.msra.mxu0 0.0
        %938 = vmatprep.subr.mxu0 0.0
        %939 = vmatpush1.msra.mxu0 0.0
        %940 = vmatprep.subr.mxu0 0.0
        %941 = vmatpush1.msra.mxu0 0.0
        %942 = vmatprep.subr.mxu0 0.0
        %943 = vmatpush1.msra.mxu0 0.0
        %944 = vmatprep.subr.mxu0 0.0
        %945 = vmatpush1.msra.mxu0 0.0
        %946 = vmatprep.subr.mxu0 0.0
        %947 = vmatpush1.msra.mxu0 0.0
        %948 = vmatprep.subr.mxu0 0.0
        %949 = vmatpush1.msra.mxu0 0.0
        %950 = vmatprep.subr.mxu0 0.0
        %951 = vmatpush1.msra.mxu0 0.0
        %952 = vmatprep.subr.mxu0 0.0
        %953 = vmatpush1.msra.mxu0 0.0
        %954 = vmatprep.subr.mxu0 0.0
        %955 = vmatpush1.msra.mxu0 0.0
        %956 = vmatprep.subr.mxu0 0.0
        %957 = vmatpush1.msra.mxu0 0.0
        %958 = vmatprep.subr.mxu0 0.0
        %959 = vmatpush1.msra.mxu0 0.0
        %960 = vmatprep.subr.mxu0 0.0
        %961 = vmatpush1.msra.mxu0 0.0
        %962 = vmatprep.subr.mxu0 0.0
        %963 = vmatpush1.msra.mxu0 0.0
        %964 = vmatprep.subr.mxu0 0.0
        %965 = vmatpush1.msra.mxu0 0.0
        %966 = vmatprep.subr.mxu0 0.0
        %967 = vmatpush1.msra.mxu0 0.0
        %968 = vmatprep.subr.mxu0 0.0
        %969 = vmatpush1.msra.mxu0 0.0
        %970 = vmatprep.mubr.f32.mxu0 0.0
        %971 = vmatmul.mubr.f32.gmra.mrb[0].mxu0 %v904
        %v972 = vpop.f32.mrb[0].mxu0
        %v973 = vadd.f32 %v900, %v972
        %v974 = vpop.f32.mrb[0].mxu0
        %975 = vdwg.mxu0
        %v976 = vld [vmem:[%s9] sm:$0x1]
        %v977 = vadd.f32 %v973, %v976
        %v978 = vld [vmem:[%s10] sm:$0x1]
        %v979 = vld [vmem:[%s11] sm:$0x1]
        %vm980 = vcmask 516096
        %v981 = vsel %vm980, %v977, 0.0
        %982 = vadd.xlane.f32.xlu0 %v981
        %v983 = vpop.xlane.xlu0 %982
        %v984 = vrcp.pop 64.0
        %v985 = vmul.f32 %v983, %v984
        %v986 = vsub.f32 %v977, %v985
        %v987 = vmul.f32 %v986, %v986
        %v988 = vsel %vm980, %v987, 0.0
        %989 = vadd.xlane.f32.xlu0 %v988
        %v990 = vpop.xlane.xlu0 %989
        %v991 = vmul.f32 %v990, %v984
        %v992 = vadd.f32 %v991, 1e-05
        %v993 = vrsqrt.pop %v992
        %v994 = vmul.f32 %v986, %v993
        %v995 = vmul.f32 %v978, %v994
        %v996 = vadd.f32 %v995, %v979
        %v997 = vmax.f32 %v996, 0.0
        %998 = vst.msk [vmem:[%s541] sm:$0x1] %vm980, %v997
        %s999 = sand.u32 %s312, 1
        %s1000 = scalar_lea.sflag [#allocation6], %s999
        %s1001 = sand.u32 %s312, 1
        %s1002 = scalar_lea.vmem [#allocation12], %s1001
        // Predicated region
        $region81: #{tpu_custom_call.1} parent=63 // pred_check
          %p1003 = pneg %p322
        $region82: #{tpu_custom_call.1} parent=63 // pred_check_branch
          %1005 = sbr.rel (%p1003) target = $region84
        $region83: #{tpu_custom_call.1} parent=63 // pred_region
          %s1007 = ssub.s32 16, 16
          %1008 = vsyncadd %s1000, %s1007
          %s1009 = smul.addr %s37, 16
          %s1010 = scalar_lea.hbm %s12, %s1009
          %s1012 = sshll.u32 %s1002, 4
          %s1013 = int_to_ptr.vmem [resolvable:$true] %s1012
          %1015 = dma.vmem_to_hbm [thread:$0]  %s1013, 16, %s1010, %s1000
        $region84: #{tpu_custom_call.1} parent=63 // pred_fallthru
          _
      $region64: #{tpu_custom_call.1} parent=5 // pred_fallthru
        _
      %p1016 = scmp.le.s32.totalorder 2, %s32
      // Predicated region
      $region85: #{tpu_custom_call.1} parent=5 // pred_check
        %p1017 = pneg %p1016
      $region86: #{tpu_custom_call.1} parent=5 // pred_check_branch
        %1019 = sbr.rel (%p1017) target = $region88
      $region87: #{tpu_custom_call.1} parent=5 // pred_region
        %s1020 = ssub.s32 %s32, 2
        // Predicated region
        $region89: #{tpu_custom_call.1} parent=87 // pred_check
          %p1021 = pneg %p328
        $region90: #{tpu_custom_call.1} parent=87 // pred_check_branch
          %1023 = sbr.rel (%p1021) target = $region92
        $region91: #{tpu_custom_call.1} parent=87 // pred_region
          %s1024 = sand.u32 %s313, 1
          %s1025 = scalar_lea.sflag [#allocation6], %s1024
          %s1026 = sand.u32 %s313, 1
          %s1027 = scalar_lea.vmem [#allocation12], %s1026
          %1028 = dma.done %s1025, 16
        $region92: #{tpu_custom_call.1} parent=87 // pred_fallthru
          _
      $region88: #{tpu_custom_call.1} parent=5 // pred_fallthru
        _
    $region6: #{tpu_custom_call.1} parent=1 // loop_footer
      %s36 = sadd.s32 1, %s32
    $region7: #{tpu_custom_call.1} parent=1 // loop_footer_branch
      %31 = sbr.rel target = $region3
    $region8: #{tpu_custom_call.1} parent=1 // loop_exit
      _
    %1029 = vsyncpa [#allocation5], 1
    %s1030 = scalar_lea.sflag [#allocation5], 1
    %1031 = vsyncpa %s1030, 1
    %1032 = vsyncpa [#allocation8], 1
    %s1033 = scalar_lea.sflag [#allocation8], 1
    %1034 = vsyncpa %s1033, 1
    %1035 = vsyncpa [#allocation11], 1
    %1036 = vsyncpa [#allocation6], 1
    %s1037 = scalar_lea.sflag [#allocation6], 1
    %1038 = vsyncpa %s1037, 1

</llo_original>
